<compile_context>
chip_gen: v5e
topology: v5e:2x2
jax: 0.10.0
libtpu: 0.0.40
codegen_flags: <defaults>
</compile_context>

<pallas_src>
import math

import jax
import jax.numpy as jnp
from jax.experimental import pallas as pl
from jax.experimental.pallas import tpu as pltpu


# ---------------------------------------------------------------------------
# Pallas kernel
# ---------------------------------------------------------------------------
def _make_data_embedding_kernel(*, b_tile, seq_len, l_tile, n_l_tiles,
                                c_in, kmax, kc, kc_pad, compute_dtype):
    p_max = (kmax - 1) // 2

    def build_one(x):
        """x: [L, C] f32  ->  circular im2col [L, kc_pad] f32 (zeros in lanes >= kc)."""
        if kc <= 128:
            # Lane-aligned build: one lane-pad, then per tap a sublane roll (circular shift
            # along L), a lane roll (places the C data lanes at offset j*C) and an add.
            zpad = jnp.zeros((seq_len, kc_pad - c_in), jnp.float32)
            xp = jnp.concatenate([x, zpad], axis=-1)                  # [L, kc_pad]
            acc = None
            for j in range(kmax):
                s = (p_max - j) % seq_len                             # roll[t] = x[(t+j-p_max) % L]
                piece = xp if s == 0 else pltpu.roll(xp, shift=s, axis=0)
                if j > 0:
                    piece = pltpu.roll(piece, shift=j * c_in, axis=1)  # no wrap: kc <= 128
                acc = piece if acc is None else acc + piece
            return acc
        # Fallback for kc > 128 (wide c_in): lane-minor concatenate of rolled copies.
        cols = []
        for j in range(kmax):
            s = (p_max - j) % seq_len
            cols.append(x if s == 0 else pltpu.roll(x, shift=s, axis=0))
        if kc_pad > kc:
            cols.append(jnp.zeros((seq_len, kc_pad - kc), jnp.float32))
        return jnp.concatenate(cols, axis=-1)

    def kernel(x_ref, w_ref, pe_ref, o_ref, col_ref):
        # x_ref  : [Bt, L, C]        batch tile, full sequence (f32)
        # w_ref  : [kc_pad, D]       fused + zero-padded conv weight (compute_dtype), resident
        # pe_ref : [L, D]            positional table (f32), resident (read from HBM once)
        # o_ref  : [Bt, TL, D]       output tile
        # col_ref: [Bt*L, kc_pad]    im2col scratch (compute_dtype), persists across L-tiles
        l = pl.program_id(1)

        def _build_im2col():
            for bi in range(b_tile):                     # static, small
                col = build_one(x_ref[bi])
                col_ref[pl.ds(bi * seq_len, seq_len), :] = col.astype(compute_dtype)

        if n_l_tiles == 1:
            _build_im2col()
        else:
            pl.when(l == 0)(_build_im2col)               # build once per batch element

        w = w_ref[...]
        if n_l_tiles == 1:
            # One big MXU contraction per grid step over all Bt batch elements.
            y = jnp.dot(col_ref[...], w, preferred_element_type=jnp.float32)  # [Bt*L, D]
            pe = pe_ref[...]
            for bi in range(b_tile):
                o_ref[bi] = (y[bi * seq_len:(bi + 1) * seq_len, :] + pe).astype(o_ref.dtype)
        else:
            # L-tiled path (b_tile == 1): slice the resident im2col / pe.
            t0 = pl.multiple_of(l * l_tile, l_tile)
            window = col_ref[pl.ds(t0, l_tile), :]
            y = jnp.dot(window, w, preferred_element_type=jnp.float32)        # [TL, D]
            o_ref[0] = (y + pe_ref[pl.ds(t0, l_tile), :]).astype(o_ref.dtype)

    return kernel


# ---------------------------------------------------------------------------
# Parameter init (synthetic, torch-style kaiming), weight fusion, pos-emb table
# ---------------------------------------------------------------------------
def _kaiming_normal(key, shape, fan_in):
    gain = math.sqrt(2.0 / (1.0 + 0.01 ** 2))
    std = gain / math.sqrt(fan_in)
    return std * jax.random.normal(key, shape, jnp.float32)


def init_token_embedding_weights(key, c_in, d_model):
    """Per-bank Conv1d weights in torch layout [O, C, K] (banks: k = 1, 3, 5, 7, c_in)."""
    o_small, o_big = d_model // 8, d_model // 2
    kernel_sizes = [1, 3, 5, 7, c_in]
    out_chs = [o_small, o_small, o_small, o_small, o_big]
    keys = jax.random.split(key, 5)
    return tuple(_kaiming_normal(kk, (O, c_in, K), c_in * K)
                 for kk, K, O in zip(keys, kernel_sizes, out_chs))


def fuse_token_conv_weights(bank_weights, d_model):
    """Fuse the 5 conv banks into one [kmax*C, d_model] weight (trace-time, plain JAX)."""
    c_in = bank_weights[0].shape[1]
    k_sizes = [int(w.shape[2]) for w in bank_weights]
    assert all(k % 2 == 1 for k in k_sizes), "kernel sizes must be odd ('same' circular conv)"
    kmax = max(k_sizes)
    p_max = (kmax - 1) // 2

    w_fused = jnp.zeros((kmax, c_in, d_model), jnp.float32)
    col = 0
    for w in bank_weights:                       # torch layout (O, C, K)
        O, _, K = w.shape
        off = p_max - (K - 1) // 2
        w_fused = w_fused.at[off:off + K, :, col:col + O].set(jnp.transpose(w, (2, 1, 0)))
        col += O
    assert col == d_model, "bank output widths must sum to d_model (d_model % 8 == 0)"
    return w_fused.reshape(kmax * c_in, d_model), kmax


def positional_embedding_table(seq_len, d_model):
    position = jnp.arange(seq_len, dtype=jnp.float32)[:, None]
    div_term = jnp.exp(jnp.arange(0, d_model, 2, dtype=jnp.float32)
                       * (-math.log(10000.0) / d_model))
    pe = jnp.zeros((seq_len, d_model), jnp.float32)
    pe = pe.at[:, 0::2].set(jnp.sin(position * div_term))
    pe = pe.at[:, 1::2].set(jnp.cos(position * div_term))
    return pe


def _pick_l_tile(seq_len):
    if seq_len <= 1024:            # cap raised per v5e/v6e feedback; no tiling if it fits
        return seq_len
    for t in (1024, 512, 256, 128, 64, 32, 16):   # multiples of 16 -> bf16-scratch safe
        if seq_len % t == 0:
            return t
    return seq_len


def _pick_b_tile(B, L, l_tile, kc_pad, col_itemsize):
    """Batch-block only when L is untiled; keep scratch + lane-padded x buffers modest."""
    if l_tile != L:
        return 1
    if col_itemsize < 4 and L % 16 != 0:
        return 1                              # keep 16-bit scratch writes packed-tile aligned
    best = 1
    for bt in range(1, B + 1):
        if B % bt != 0:
            continue
        if bt * L > 2048:                     # matmul M already large enough
            continue
        scratch_bytes = bt * L * kc_pad * col_itemsize
        x_buf_bytes = 2 * bt * L * 128 * 4    # C lane-pads to 128 in VMEM, double-buffered
        if scratch_bytes + x_buf_bytes > 12 * (1 << 20):
            continue
        best = bt
    return best


# ---------------------------------------------------------------------------
# Wrapper
# ---------------------------------------------------------------------------
def data_embedding(x, w_fused_flat, kmax, d_model, x_mark=None, *,
                   compute_dtype=jnp.bfloat16, out_dtype=jnp.float32,
                   l_tile=None, b_tile=None):
    """Forward pass of DataEmbedding.  x: [B, L, c_in] f32 -> [B, L, d_model] out_dtype."""
    if x_mark is not None:
        x = jnp.concatenate([x, x_mark], axis=-2)   # torch.cat(dim=-2): sequence axis
    B, L, C = (int(s) for s in x.shape)
    assert d_model % 8 == 0, "d_model must be divisible by 8 (bank widths sum to d_model)"
    assert kmax % 2 == 1, "largest kernel size (max(7, c_in)) must be odd -> c_in odd"
    assert L % 8 == 0, "sequence length must be a multiple of 8 (sublane rolls / slices)"

    KC = kmax * C
    assert w_fused_flat.shape == (KC, d_model)
    kc_pad = ((KC + 127) // 128) * 128              # lane-aligned contraction dim

    # Zero-pad the fused weight rows to kc_pad (padded im2col lanes are also zero).
    w_pad = jnp.zeros((kc_pad, d_model), jnp.float32).at[:KC, :].set(
        w_fused_flat.astype(jnp.float32))
    w_c = w_pad.astype(compute_dtype)               # bf16 weight traffic / bf16 MXU path

    pe = positional_embedding_table(L, d_model)     # == torch pe[:, :L]; resident, read once

    itemsize_c = jnp.dtype(compute_dtype).itemsize
    itemsize_o = jnp.dtype(out_dtype).itemsize

    if l_tile is None:
        l_tile = _pick_l_tile(L)
    assert L % l_tile == 0
    if itemsize_c < 4 and l_tile != L:
        assert l_tile % 16 == 0, "16-bit scratch slices must be packed-sublane aligned"
    n_l_tiles = L // l_tile

    if b_tile is None:
        b_tile = _pick_b_tile(B, L, l_tile, kc_pad, itemsize_c)
    assert B % b_tile == 0
    assert b_tile == 1 or n_l_tiles == 1, "batch blocking only with an untiled L axis"
    if itemsize_c < 4 and b_tile > 1:
        assert L % 16 == 0

    kernel = _make_data_embedding_kernel(
        b_tile=b_tile, seq_len=L, l_tile=l_tile, n_l_tiles=n_l_tiles,
        c_in=C, kmax=kmax, kc=KC, kc_pad=kc_pad, compute_dtype=compute_dtype)

    # VMEM budget (per v6e scoped-default / v7x 64-MiB feedback): x buffers are lane-padded.
    est_vmem = (b_tile * L * kc_pad * itemsize_c          # im2col scratch
                + 2 * b_tile * L * 128 * 4                # x blocks (double-buffered)
                + 2 * kc_pad * d_model * itemsize_c       # weight
                + 2 * L * d_model * 4                     # resident pe
                + 2 * b_tile * l_tile * d_model * itemsize_o)   # output tiles
    vmem_limit = int(min(100 * (1 << 20), max(32 * (1 << 20), 2 * est_vmem + (1 << 20))))

    cost = pl.CostEstimate(
        flops=2 * B * L * KC * d_model,
        bytes_accessed=int(B * L * C * 4 + kc_pad * d_model * itemsize_c
                           + L * d_model * 4 + B * L * d_model * itemsize_o),
        transcendentals=0)

    out = pl.pallas_call(
        kernel,
        out_shape=jax.ShapeDtypeStruct((B, L, d_model), out_dtype),
        grid=(B // b_tile, n_l_tiles),
        in_specs=[
            # batch tile, full (small) sequence; constant in l -> fetched once per batch tile
            pl.BlockSpec((b_tile, L, C), lambda b, l: (b, 0, 0)),
            # fused weight: constant index -> resident, DMA'd once
            pl.BlockSpec((kc_pad, d_model), lambda b, l: (0, 0)),
            # positional table: constant index -> resident, DMA'd once (was re-read per b)
            pl.BlockSpec((L, d_model), lambda b, l: (0, 0)),
        ],
        out_specs=pl.BlockSpec((b_tile, l_tile, d_model), lambda b, l: (b, l, 0)),
        scratch_shapes=[pltpu.VMEM((b_tile * L, kc_pad), compute_dtype)],   # im2col
        compiler_params=pltpu.CompilerParams(
            # batch-tile axis "parallel" (megacore sharding on v7x; near no-op on 1-TC chips),
            # L-tile axis "arbitrary" (im2col scratch is reused across L-tiles).
            # If 2-TC sharding is not picked up on v7x, switch to pltpu.CORE_PARALLEL here.
            dimension_semantics=("parallel", "arbitrary"),
            vmem_limit_bytes=vmem_limit),
        cost_estimate=cost,
    )(x, w_c, pe)

    # nn.Dropout(p=0.1) is identity at inference time (eval mode) -> no-op here.
    return out


# ---------------------------------------------------------------------------
# Pure-JAX reference (structured like the PyTorch module: 5 separate circular convs)
# ---------------------------------------------------------------------------
def _reference_data_embedding(x, bank_weights, d_model, x_mark=None,
                              compute_dtype=jnp.bfloat16):
    if x_mark is not None:
        x = jnp.concatenate([x, x_mark], axis=-2)
    B, L, C = x.shape
    pe = positional_embedding_table(L, d_model)
    xb = x.astype(compute_dtype)
    outs = []
    for w in bank_weights:                       # torch layout (O, C, K)
        O, _, K = w.shape
        p = (K - 1) // 2
        wb = w.astype(compute_dtype)
        acc = jnp.zeros((B, L, O), jnp.float32)
        for k in range(K):
            xs = jnp.roll(xb, shift=p - k, axis=1)          # x[(t + k - p) mod L]
            acc = acc + jnp.einsum("blc,oc->blo", xs, wb[:, :, k],
                                   preferred_element_type=jnp.float32)
        outs.append(acc)
    return jnp.concatenate(outs, axis=-1) + pe[None]


if __name__ == "__main__":
    key = jax.random.PRNGKey(0)
    kx, kw, kx2 = jax.random.split(key, 3)

    # c_in odd (so the k=c_in bank's circular 'same' padding preserves length, as in torch);
    # d_model multiple of 8 (bank widths sum to d_model) and of 128 (lane-dense stores).
    c_in, d_model = 7, 128
    bank_ws = init_token_embedding_weights(kw, c_in, d_model)
    w_flat, kmax = fuse_token_conv_weights(bank_ws, d_model)

    # Config 1: tiny L -> untiled L axis, batch-blocked single-step grid.
    B, L = 4, 16
    x = jax.random.normal(kx, (B, L, c_in), jnp.float32)
    out = jax.block_until_ready(data_embedding(x, w_flat, kmax, d_model, x_mark=None))
    assert out.shape == (B, L, d_model) and out.dtype == jnp.float32
    assert bool(jnp.all(jnp.isfinite(out)))
    ref = _reference_data_embedding(x, bank_ws, d_model)
    err = float(jnp.max(jnp.abs(out - ref)))
    assert bool(jnp.allclose(out, ref, atol=2e-3, rtol=2e-3)), err

    # Config 2: larger L with an explicitly tiled L axis (resident pe sliced per tile).
    B2, L2 = 2, 256
    x2 = jax.random.normal(kx2, (B2, L2, c_in), jnp.float32)
    out2 = jax.block_until_ready(data_embedding(x2, w_flat, kmax, d_model, l_tile=128))
    assert out2.shape == (B2, L2, d_model)
    ref2 = _reference_data_embedding(x2, bank_ws, d_model)
    err2 = float(jnp.max(jnp.abs(out2 - ref2)))
    assert bool(jnp.allclose(out2, ref2, atol=2e-3, rtol=2e-3)), err2

    print("KERNEL_OK")
</pallas_src>

<mosaic_0001>
module attributes {stable_mosaic.version = 11 : i64} {
  func.func @kernel(%arg0: i32, %arg1: i32, %arg2: memref<4x16x7xf32, #tpu.memory_space<vmem>>, %arg3: memref<128x128xbf16, #tpu.memory_space<vmem>>, %arg4: memref<16x128xf32, #tpu.memory_space<vmem>>, %arg5: memref<4x16x128xf32, #tpu.memory_space<vmem>>, %arg6: memref<64x128xbf16, #tpu.memory_space<vmem>>) attributes {dimension_semantics = [#tpu.dimension_semantics<parallel>, #tpu.dimension_semantics<arbitrary>], iteration_bounds = array<i64: 1, 1>, scalar_prefetch = 0 : i64, scratch_operands = 1 : i64, tpu.core_type = #tpu.core_type<tc>, window_params = [{transform_indices = @transform_0, window_bounds = array<i64: 4, 16, 7>}, {pipeline_mode = #tpu.pipeline_mode<synchronous>, transform_indices = @transform_1, window_bounds = array<i64: 128, 128>}, {pipeline_mode = #tpu.pipeline_mode<synchronous>, transform_indices = @transform_2, window_bounds = array<i64: 16, 128>}, {transform_indices = @transform_3, window_bounds = array<i64: 4, 16, 128>}]} {
    %c0 = arith.constant 0 : index
    %c0_0 = arith.constant 0 : index
    %c0_1 = arith.constant 0 : index
    %0 = vector.load %arg2[%c0, %c0_0, %c0_1] : memref<4x16x7xf32, #tpu.memory_space<vmem>>, vector<1x16x7xf32>
    %1 = vector.shape_cast %0 : vector<1x16x7xf32> to vector<16x7xf32>
    %cst = arith.constant 0.000000e+00 : f32
    %2 = vector.broadcast %cst : f32 to vector<16x121xf32>
    %3 = tpu.concatenate %1, %2 in 1 : vector<16x7xf32>, vector<16x121xf32> -> vector<16x128xf32>
    %c3_i32 = arith.constant 3 : i32
    %4 = tpu.dynamic_rotate %3 by %c3_i32 dim 0 : vector<16x128xf32>, i32 -> vector<16x128xf32>
    %c2_i32 = arith.constant 2 : i32
    %5 = tpu.dynamic_rotate %3 by %c2_i32 dim 0 : vector<16x128xf32>, i32 -> vector<16x128xf32>
    %c7_i32 = arith.constant 7 : i32
    %6 = tpu.dynamic_rotate %5 by %c7_i32 dim 1 : vector<16x128xf32>, i32 -> vector<16x128xf32>
    %7 = arith.addf %4, %6 : vector<16x128xf32>
    %c1_i32 = arith.constant 1 : i32
    %8 = tpu.dynamic_rotate %3 by %c1_i32 dim 0 : vector<16x128xf32>, i32 -> vector<16x128xf32>
    %c14_i32 = arith.constant 14 : i32
    %9 = tpu.dynamic_rotate %8 by %c14_i32 dim 1 : vector<16x128xf32>, i32 -> vector<16x128xf32>
    %10 = arith.addf %7, %9 : vector<16x128xf32>
    %c21_i32 = arith.constant 21 : i32
    %11 = tpu.dynamic_rotate %3 by %c21_i32 dim 1 : vector<16x128xf32>, i32 -> vector<16x128xf32>
    %12 = arith.addf %10, %11 : vector<16x128xf32>
    %c15_i32 = arith.constant 15 : i32
    %13 = tpu.dynamic_rotate %3 by %c15_i32 dim 0 : vector<16x128xf32>, i32 -> vector<16x128xf32>
    %c28_i32 = arith.constant 28 : i32
    %14 = tpu.dynamic_rotate %13 by %c28_i32 dim 1 : vector<16x128xf32>, i32 -> vector<16x128xf32>
    %15 = arith.addf %12, %14 : vector<16x128xf32>
    %c14_i32_2 = arith.constant 14 : i32
    %16 = tpu.dynamic_rotate %3 by %c14_i32_2 dim 0 : vector<16x128xf32>, i32 -> vector<16x128xf32>
    %c35_i32 = arith.constant 35 : i32
    %17 = tpu.dynamic_rotate %16 by %c35_i32 dim 1 : vector<16x128xf32>, i32 -> vector<16x128xf32>
    %18 = arith.addf %15, %17 : vector<16x128xf32>
    %c13_i32 = arith.constant 13 : i32
    %19 = tpu.dynamic_rotate %3 by %c13_i32 dim 0 : vector<16x128xf32>, i32 -> vector<16x128xf32>
    %c42_i32 = arith.constant 42 : i32
    %20 = tpu.dynamic_rotate %19 by %c42_i32 dim 1 : vector<16x128xf32>, i32 -> vector<16x128xf32>
    %21 = arith.addf %18, %20 : vector<16x128xf32>
    %22 = arith.truncf %21 : vector<16x128xf32> to vector<16x128xbf16>
    %c0_3 = arith.constant 0 : index
    %c0_4 = arith.constant 0 : index
    %23 = vector.load %arg6[%c0_3, %c0_4] : memref<64x128xbf16, #tpu.memory_space<vmem>>, vector<16x128xbf16>
    tpu.vector_store %arg6[%c0_3, %c0_4], %22 {strides = array<i32>} : memref<64x128xbf16, #tpu.memory_space<vmem>>, vector<16x128xbf16>,
    %c1 = arith.constant 1 : index
    %c0_5 = arith.constant 0 : index
    %c0_6 = arith.constant 0 : index
    %24 = vector.load %arg2[%c1, %c0_5, %c0_6] : memref<4x16x7xf32, #tpu.memory_space<vmem>>, vector<1x16x7xf32>
    %25 = vector.shape_cast %24 : vector<1x16x7xf32> to vector<16x7xf32>
    %cst_7 = arith.constant 0.000000e+00 : f32
    %26 = vector.broadcast %cst_7 : f32 to vector<16x121xf32>
    %27 = tpu.concatenate %25, %26 in 1 : vector<16x7xf32>, vector<16x121xf32> -> vector<16x128xf32>
    %c3_i32_8 = arith.constant 3 : i32
    %28 = tpu.dynamic_rotate %27 by %c3_i32_8 dim 0 : vector<16x128xf32>, i32 -> vector<16x128xf32>
    %c2_i32_9 = arith.constant 2 : i32
    %29 = tpu.dynamic_rotate %27 by %c2_i32_9 dim 0 : vector<16x128xf32>, i32 -> vector<16x128xf32>
    %c7_i32_10 = arith.constant 7 : i32
    %30 = tpu.dynamic_rotate %29 by %c7_i32_10 dim 1 : vector<16x128xf32>, i32 -> vector<16x128xf32>
    %31 = arith.addf %28, %30 : vector<16x128xf32>
    %c1_i32_11 = arith.constant 1 : i32
    %32 = tpu.dynamic_rotate %27 by %c1_i32_11 dim 0 : vector<16x128xf32>, i32 -> vector<16x128xf32>
    %c14_i32_12 = arith.constant 14 : i32
    %33 = tpu.dynamic_rotate %32 by %c14_i32_12 dim 1 : vector<16x128xf32>, i32 -> vector<16x128xf32>
    %34 = arith.addf %31, %33 : vector<16x128xf32>
    %c21_i32_13 = arith.constant 21 : i32
    %35 = tpu.dynamic_rotate %27 by %c21_i32_13 dim 1 : vector<16x128xf32>, i32 -> vector<16x128xf32>
    %36 = arith.addf %34, %35 : vector<16x128xf32>
    %c15_i32_14 = arith.constant 15 : i32
    %37 = tpu.dynamic_rotate %27 by %c15_i32_14 dim 0 : vector<16x128xf32>, i32 -> vector<16x128xf32>
    %c28_i32_15 = arith.constant 28 : i32
    %38 = tpu.dynamic_rotate %37 by %c28_i32_15 dim 1 : vector<16x128xf32>, i32 -> vector<16x128xf32>
    %39 = arith.addf %36, %38 : vector<16x128xf32>
    %c14_i32_16 = arith.constant 14 : i32
    %40 = tpu.dynamic_rotate %27 by %c14_i32_16 dim 0 : vector<16x128xf32>, i32 -> vector<16x128xf32>
    %c35_i32_17 = arith.constant 35 : i32
    %41 = tpu.dynamic_rotate %40 by %c35_i32_17 dim 1 : vector<16x128xf32>, i32 -> vector<16x128xf32>
    %42 = arith.addf %39, %41 : vector<16x128xf32>
    %c13_i32_18 = arith.constant 13 : i32
    %43 = tpu.dynamic_rotate %27 by %c13_i32_18 dim 0 : vector<16x128xf32>, i32 -> vector<16x128xf32>
    %c42_i32_19 = arith.constant 42 : i32
    %44 = tpu.dynamic_rotate %43 by %c42_i32_19 dim 1 : vector<16x128xf32>, i32 -> vector<16x128xf32>
    %45 = arith.addf %42, %44 : vector<16x128xf32>
    %46 = arith.truncf %45 : vector<16x128xf32> to vector<16x128xbf16>
    %c16 = arith.constant 16 : index
    %c0_20 = arith.constant 0 : index
    %47 = vector.load %arg6[%c16, %c0_20] : memref<64x128xbf16, #tpu.memory_space<vmem>>, vector<16x128xbf16>
    tpu.vector_store %arg6[%c16, %c0_20], %46 {strides = array<i32>} : memref<64x128xbf16, #tpu.memory_space<vmem>>, vector<16x128xbf16>,
    %c2 = arith.constant 2 : index
    %c0_21 = arith.constant 0 : index
    %c0_22 = arith.constant 0 : index
    %48 = vector.load %arg2[%c2, %c0_21, %c0_22] : memref<4x16x7xf32, #tpu.memory_space<vmem>>, vector<1x16x7xf32>
    %49 = vector.shape_cast %48 : vector<1x16x7xf32> to vector<16x7xf32>
    %cst_23 = arith.constant 0.000000e+00 : f32
    %50 = vector.broadcast %cst_23 : f32 to vector<16x121xf32>
    %51 = tpu.concatenate %49, %50 in 1 : vector<16x7xf32>, vector<16x121xf32> -> vector<16x128xf32>
    %c3_i32_24 = arith.constant 3 : i32
    %52 = tpu.dynamic_rotate %51 by %c3_i32_24 dim 0 : vector<16x128xf32>, i32 -> vector<16x128xf32>
    %c2_i32_25 = arith.constant 2 : i32
    %53 = tpu.dynamic_rotate %51 by %c2_i32_25 dim 0 : vector<16x128xf32>, i32 -> vector<16x128xf32>
    %c7_i32_26 = arith.constant 7 : i32
    %54 = tpu.dynamic_rotate %53 by %c7_i32_26 dim 1 : vector<16x128xf32>, i32 -> vector<16x128xf32>
    %55 = arith.addf %52, %54 : vector<16x128xf32>
    %c1_i32_27 = arith.constant 1 : i32
    %56 = tpu.dynamic_rotate %51 by %c1_i32_27 dim 0 : vector<16x128xf32>, i32 -> vector<16x128xf32>
    %c14_i32_28 = arith.constant 14 : i32
    %57 = tpu.dynamic_rotate %56 by %c14_i32_28 dim 1 : vector<16x128xf32>, i32 -> vector<16x128xf32>
    %58 = arith.addf %55, %57 : vector<16x128xf32>
    %c21_i32_29 = arith.constant 21 : i32
    %59 = tpu.dynamic_rotate %51 by %c21_i32_29 dim 1 : vector<16x128xf32>, i32 -> vector<16x128xf32>
    %60 = arith.addf %58, %59 : vector<16x128xf32>
    %c15_i32_30 = arith.constant 15 : i32
    %61 = tpu.dynamic_rotate %51 by %c15_i32_30 dim 0 : vector<16x128xf32>, i32 -> vector<16x128xf32>
    %c28_i32_31 = arith.constant 28 : i32
    %62 = tpu.dynamic_rotate %61 by %c28_i32_31 dim 1 : vector<16x128xf32>, i32 -> vector<16x128xf32>
    %63 = arith.addf %60, %62 : vector<16x128xf32>
    %c14_i32_32 = arith.constant 14 : i32
    %64 = tpu.dynamic_rotate %51 by %c14_i32_32 dim 0 : vector<16x128xf32>, i32 -> vector<16x128xf32>
    %c35_i32_33 = arith.constant 35 : i32
    %65 = tpu.dynamic_rotate %64 by %c35_i32_33 dim 1 : vector<16x128xf32>, i32 -> vector<16x128xf32>
    %66 = arith.addf %63, %65 : vector<16x128xf32>
    %c13_i32_34 = arith.constant 13 : i32
    %67 = tpu.dynamic_rotate %51 by %c13_i32_34 dim 0 : vector<16x128xf32>, i32 -> vector<16x128xf32>
    %c42_i32_35 = arith.constant 42 : i32
    %68 = tpu.dynamic_rotate %67 by %c42_i32_35 dim 1 : vector<16x128xf32>, i32 -> vector<16x128xf32>
    %69 = arith.addf %66, %68 : vector<16x128xf32>
    %70 = arith.truncf %69 : vector<16x128xf32> to vector<16x128xbf16>
    %c32 = arith.constant 32 : index
    %c0_36 = arith.constant 0 : index
    %71 = vector.load %arg6[%c32, %c0_36] : memref<64x128xbf16, #tpu.memory_space<vmem>>, vector<16x128xbf16>
    tpu.vector_store %arg6[%c32, %c0_36], %70 {strides = array<i32>} : memref<64x128xbf16, #tpu.memory_space<vmem>>, vector<16x128xbf16>,
    %c3 = arith.constant 3 : index
    %c0_37 = arith.constant 0 : index
    %c0_38 = arith.constant 0 : index
    %72 = vector.load %arg2[%c3, %c0_37, %c0_38] : memref<4x16x7xf32, #tpu.memory_space<vmem>>, vector<1x16x7xf32>
    %73 = vector.shape_cast %72 : vector<1x16x7xf32> to vector<16x7xf32>
    %cst_39 = arith.constant 0.000000e+00 : f32
    %74 = vector.broadcast %cst_39 : f32 to vector<16x121xf32>
    %75 = tpu.concatenate %73, %74 in 1 : vector<16x7xf32>, vector<16x121xf32> -> vector<16x128xf32>
    %c3_i32_40 = arith.constant 3 : i32
    %76 = tpu.dynamic_rotate %75 by %c3_i32_40 dim 0 : vector<16x128xf32>, i32 -> vector<16x128xf32>
    %c2_i32_41 = arith.constant 2 : i32
    %77 = tpu.dynamic_rotate %75 by %c2_i32_41 dim 0 : vector<16x128xf32>, i32 -> vector<16x128xf32>
    %c7_i32_42 = arith.constant 7 : i32
    %78 = tpu.dynamic_rotate %77 by %c7_i32_42 dim 1 : vector<16x128xf32>, i32 -> vector<16x128xf32>
    %79 = arith.addf %76, %78 : vector<16x128xf32>
    %c1_i32_43 = arith.constant 1 : i32
    %80 = tpu.dynamic_rotate %75 by %c1_i32_43 dim 0 : vector<16x128xf32>, i32 -> vector<16x128xf32>
    %c14_i32_44 = arith.constant 14 : i32
    %81 = tpu.dynamic_rotate %80 by %c14_i32_44 dim 1 : vector<16x128xf32>, i32 -> vector<16x128xf32>
    %82 = arith.addf %79, %81 : vector<16x128xf32>
    %c21_i32_45 = arith.constant 21 : i32
    %83 = tpu.dynamic_rotate %75 by %c21_i32_45 dim 1 : vector<16x128xf32>, i32 -> vector<16x128xf32>
    %84 = arith.addf %82, %83 : vector<16x128xf32>
    %c15_i32_46 = arith.constant 15 : i32
    %85 = tpu.dynamic_rotate %75 by %c15_i32_46 dim 0 : vector<16x128xf32>, i32 -> vector<16x128xf32>
    %c28_i32_47 = arith.constant 28 : i32
    %86 = tpu.dynamic_rotate %85 by %c28_i32_47 dim 1 : vector<16x128xf32>, i32 -> vector<16x128xf32>
    %87 = arith.addf %84, %86 : vector<16x128xf32>
    %c14_i32_48 = arith.constant 14 : i32
    %88 = tpu.dynamic_rotate %75 by %c14_i32_48 dim 0 : vector<16x128xf32>, i32 -> vector<16x128xf32>
    %c35_i32_49 = arith.constant 35 : i32
    %89 = tpu.dynamic_rotate %88 by %c35_i32_49 dim 1 : vector<16x128xf32>, i32 -> vector<16x128xf32>
    %90 = arith.addf %87, %89 : vector<16x128xf32>
    %c13_i32_50 = arith.constant 13 : i32
    %91 = tpu.dynamic_rotate %75 by %c13_i32_50 dim 0 : vector<16x128xf32>, i32 -> vector<16x128xf32>
    %c42_i32_51 = arith.constant 42 : i32
    %92 = tpu.dynamic_rotate %91 by %c42_i32_51 dim 1 : vector<16x128xf32>, i32 -> vector<16x128xf32>
    %93 = arith.addf %90, %92 : vector<16x128xf32>
    %94 = arith.truncf %93 : vector<16x128xf32> to vector<16x128xbf16>
    %c48 = arith.constant 48 : index
    %c0_52 = arith.constant 0 : index
    %95 = vector.load %arg6[%c48, %c0_52] : memref<64x128xbf16, #tpu.memory_space<vmem>>, vector<16x128xbf16>
    tpu.vector_store %arg6[%c48, %c0_52], %94 {strides = array<i32>} : memref<64x128xbf16, #tpu.memory_space<vmem>>, vector<16x128xbf16>,
    %c0_53 = arith.constant 0 : index
    %c0_54 = arith.constant 0 : index
    %96 = vector.load %arg3[%c0_53, %c0_54] : memref<128x128xbf16, #tpu.memory_space<vmem>>, vector<128x128xbf16>
    %c0_55 = arith.constant 0 : index
    %c0_56 = arith.constant 0 : index
    %97 = vector.load %arg6[%c0_55, %c0_56] : memref<64x128xbf16, #tpu.memory_space<vmem>>, vector<64x128xbf16>
    %cst_57 = arith.constant dense<0.000000e+00> : vector<64x128xf32>
    %98 = tpu.matmul %97, %96, %cst_57 {dimension_numbers = #tpu.dot_dimension_numbers<[1], [0], [0], [1], [0, 0, 1, 1], [], []>} : vector<64x128xbf16>, vector<128x128xbf16>, vector<64x128xf32> -> vector<64x128xf32>
    %c0_58 = arith.constant 0 : index
    %c0_59 = arith.constant 0 : index
    %99 = vector.load %arg4[%c0_58, %c0_59] : memref<16x128xf32, #tpu.memory_space<vmem>>, vector<16x128xf32>
    %100 = vector.extract_strided_slice %98 {offsets = [0, 0], sizes = [16, 128], strides = [1, 1]} : vector<64x128xf32> to vector<16x128xf32>
    %101 = arith.addf %100, %99 : vector<16x128xf32>
    %c0_60 = arith.constant 0 : index
    %c0_61 = arith.constant 0 : index
    %c0_62 = arith.constant 0 : index
    %102 = vector.load %arg5[%c0_60, %c0_61, %c0_62] : memref<4x16x128xf32, #tpu.memory_space<vmem>>, vector<1x16x128xf32>
    %103 = vector.shape_cast %102 : vector<1x16x128xf32> to vector<16x128xf32>
    %104 = vector.shape_cast %101 : vector<16x128xf32> to vector<1x16x128xf32>
    tpu.vector_store %arg5[%c0_60, %c0_61, %c0_62], %104 {strides = array<i32>} : memref<4x16x128xf32, #tpu.memory_space<vmem>>, vector<1x16x128xf32>,
    %105 = vector.extract_strided_slice %98 {offsets = [16, 0], sizes = [16, 128], strides = [1, 1]} : vector<64x128xf32> to vector<16x128xf32>
    %106 = arith.addf %105, %99 : vector<16x128xf32>
    %c1_63 = arith.constant 1 : index
    %c0_64 = arith.constant 0 : index
    %c0_65 = arith.constant 0 : index
    %107 = vector.load %arg5[%c1_63, %c0_64, %c0_65] : memref<4x16x128xf32, #tpu.memory_space<vmem>>, vector<1x16x128xf32>
    %108 = vector.shape_cast %107 : vector<1x16x128xf32> to vector<16x128xf32>
    %109 = vector.shape_cast %106 : vector<16x128xf32> to vector<1x16x128xf32>
    tpu.vector_store %arg5[%c1_63, %c0_64, %c0_65], %109 {strides = array<i32>} : memref<4x16x128xf32, #tpu.memory_space<vmem>>, vector<1x16x128xf32>,
    %110 = vector.extract_strided_slice %98 {offsets = [32, 0], sizes = [16, 128], strides = [1, 1]} : vector<64x128xf32> to vector<16x128xf32>
    %111 = arith.addf %110, %99 : vector<16x128xf32>
    %c2_66 = arith.constant 2 : index
    %c0_67 = arith.constant 0 : index
    %c0_68 = arith.constant 0 : index
    %112 = vector.load %arg5[%c2_66, %c0_67, %c0_68] : memref<4x16x128xf32, #tpu.memory_space<vmem>>, vector<1x16x128xf32>
    %113 = vector.shape_cast %112 : vector<1x16x128xf32> to vector<16x128xf32>
    %114 = vector.shape_cast %111 : vector<16x128xf32> to vector<1x16x128xf32>
    tpu.vector_store %arg5[%c2_66, %c0_67, %c0_68], %114 {strides = array<i32>} : memref<4x16x128xf32, #tpu.memory_space<vmem>>, vector<1x16x128xf32>,
    %115 = vector.extract_strided_slice %98 {offsets = [48, 0], sizes = [16, 128], strides = [1, 1]} : vector<64x128xf32> to vector<16x128xf32>
    %116 = arith.addf %115, %99 : vector<16x128xf32>
    %c3_69 = arith.constant 3 : index
    %c0_70 = arith.constant 0 : index
    %c0_71 = arith.constant 0 : index
    %117 = vector.load %arg5[%c3_69, %c0_70, %c0_71] : memref<4x16x128xf32, #tpu.memory_space<vmem>>, vector<1x16x128xf32>
    %118 = vector.shape_cast %117 : vector<1x16x128xf32> to vector<16x128xf32>
    %119 = vector.shape_cast %116 : vector<16x128xf32> to vector<1x16x128xf32>
    tpu.vector_store %arg5[%c3_69, %c0_70, %c0_71], %119 {strides = array<i32>} : memref<4x16x128xf32, #tpu.memory_space<vmem>>, vector<1x16x128xf32>,
    return
  }
  func.func @transform_0(%arg0: i32, %arg1: i32) -> (i32, i32, i32) {
    %c0_i32 = arith.constant 0 : i32
    %c0_i32_0 = arith.constant 0 : i32
    %c0_i32_1 = arith.constant 0 : i32
    return %arg0, %c0_i32, %c0_i32_0 : i32, i32, i32
  }
  func.func @transform_1(%arg0: i32, %arg1: i32) -> (i32, i32) {
    %c0_i32 = arith.constant 0 : i32
    %c0_i32_0 = arith.constant 0 : i32
    %c0_i32_1 = arith.constant 0 : i32
    return %c0_i32, %c0_i32_0 : i32, i32
  }
  func.func @transform_2(%arg0: i32, %arg1: i32) -> (i32, i32) {
    %c0_i32 = arith.constant 0 : i32
    %c0_i32_0 = arith.constant 0 : i32
    %c0_i32_1 = arith.constant 0 : i32
    return %c0_i32, %c0_i32_0 : i32, i32
  }
  func.func @transform_3(%arg0: i32, %arg1: i32) -> (i32, i32, i32) {
    %c0_i32 = arith.constant 0 : i32
    %c0_i32_0 = arith.constant 0 : i32
    return %arg0, %arg1, %c0_i32 : i32, i32, i32
  }
}

</mosaic_0001>

<llo_original>
// kernel: tpu_custom_call.1
$region0: #{tpu_custom_call.1}
  #allocation0 [shape = 'u32[]', space=smem, size = 0x4, offset = 0x4, fixed_abs, tag = 'smem constant byte address 0x4 - core index']
  #allocation1 [shape = 'u32[72,128]{1,0:T(1,128)}', space=vmem, size = 0x9000, scoped, tag = 'internal scratch']
  #allocation2 [shape = 'bf16[64,128]{1,0:T(8,128)(2,1)}', space=vmem, size = 0x4000, scoped, tag = 'scratch operand']
  %s0 = inlined_call_operand.vmem [shape: f32[4,16,7], index: 0, kind: input, shape index: {}]
  %s1 = inlined_call_operand.vmem [shape: bf16[128,128], index: 1, kind: input, shape index: {}]
  %s2 = inlined_call_operand.vmem [shape: f32[16,128], index: 2, kind: input, shape index: {}]
  %s3 = inlined_call_operand.hbm [shape: f32[4,16,128], index: 3, kind: output, shape index: {}]
  %s4 = sld [smem:[#allocation0]]
  $region22: #{tpu_custom_call.1} parent=0
    _
  %s6 = ssub.s32 1, %s4
  %s7 = scalar_select 0, %s6, %s4
  $region1: #{tpu_custom_call.1} parent=0
    #allocation3 [shape = 'u8[32768]{0}', space=vmem, size = 0x8000, scoped, tag = 'output window, operand 0, single buffered']
    #allocation4 [shape = 's32[1]{0}', space=sflag, size = 0x4, scoped, tag = 'scoped memory for tpu_custom_call.1']
    %8 = vsyncpa [#allocation4], 0
    // Predicated region
    $region2: #{tpu_custom_call.1} parent=1 // pred_check
      _
    $region3: #{tpu_custom_call.1} parent=1 // pred_check_branch
      %10 = sbr.rel (0) target = $region5
    $region4: #{tpu_custom_call.1} parent=1 // pred_region
      _
    $region5: #{tpu_custom_call.1} parent=1 // pred_fallthru
      _
    // Predicated region
    $region6: #{tpu_custom_call.1} parent=1 // pred_check
      _
    $region7: #{tpu_custom_call.1} parent=1 // pred_check_branch
      %12 = sbr.rel (0) target = $region9
    $region8: #{tpu_custom_call.1} parent=1 // pred_region
      _
    $region9: #{tpu_custom_call.1} parent=1 // pred_fallthru
      _
    // Predicated region
    $region10: #{tpu_custom_call.1} parent=1 // pred_check
      _
    $region11: #{tpu_custom_call.1} parent=1 // pred_check_branch
      %14 = sbr.rel (0) target = $region13
    $region12: #{tpu_custom_call.1} parent=1 // pred_region
      _
    $region13: #{tpu_custom_call.1} parent=1 // pred_fallthru
      _
    %v15 = vld [vmem:[%s0] sm:$0xff]
    %v16 = vld [vmem:[%s0 + $0x8] sm:$0xff]
    %vm17 = vcmask 56320
    %v18 = vsel %vm17, %v15, 0.0
    %v19 = vsel %vm17, %v16, 0.0
    %v20 = vrot.slane %v18, 5
    %v21 = vrot.slane %v19, 5
    %v22 = vlaneseq
    %v23 = vshrl.u32 %v22, 7
    %vm24 = vcmp.lt.s32.totalorder %v23, 3
    %v25 = vsel %vm24, %v20, %v21
    %v26 = vsel %vm24, %v21, %v20
    %v27 = vrot.slane %v18, 6
    %v28 = vrot.slane %v19, 6
    %vm29 = vcmp.lt.s32.totalorder %v23, 2
    %v30 = vsel %vm29, %v27, %v28
    %v31 = vsel %vm29, %v28, %v27
    %32 = vrot.lane.b32.xlu0 %v31, 7
    %v33 = vpop.permute.xlu0 %32
    %34 = vrot.lane.b32.xlu0 %v30, 7
    %v35 = vpop.permute.xlu0 %34
    %v36 = vadd.f32 %v26, %v33
    %v37 = vadd.f32 %v25, %v35
    %v38 = vrot.slane %v18, 7
    %v39 = vrot.slane %v19, 7
    %vm40 = vcmp.lt.s32.totalorder %v23, 1
    %v41 = vsel %vm40, %v38, %v39
    %v42 = vsel %vm40, %v39, %v38
    %43 = vrot.lane.b32.xlu0 %v42, 14
    %v44 = vpop.permute.xlu0 %43
    %45 = vrot.lane.b32.xlu0 %v41, 14
    %v46 = vpop.permute.xlu0 %45
    %v47 = vadd.f32 %v36, %v44
    %v48 = vadd.f32 %v37, %v46
    %49 = vrot.lane.b32.xlu0 %v18, 21
    %v50 = vpop.permute.xlu0 %49
    %51 = vrot.lane.b32.xlu0 %v19, 21
    %v52 = vpop.permute.xlu0 %51
    %v53 = vadd.f32 %v47, %v50
    %v54 = vadd.f32 %v48, %v52
    %v55 = vrot.slane %v18, 1
    %v56 = vrot.slane %v19, 1
    %vm57 = vcmp.lt.s32.totalorder %v23, 7
    %v58 = vsel %vm57, %v55, %v56
    %v59 = vsel %vm57, %v56, %v55
    %60 = vrot.lane.b32.xlu0 %v58, 28
    %v61 = vpop.permute.xlu0 %60
    %62 = vrot.lane.b32.xlu0 %v59, 28
    %v63 = vpop.permute.xlu0 %62
    %v64 = vadd.f32 %v53, %v61
    %v65 = vadd.f32 %v54, %v63
    %v66 = vrot.slane %v18, 2
    %v67 = vrot.slane %v19, 2
    %vm68 = vcmp.lt.s32.totalorder %v23, 6
    %v69 = vsel %vm68, %v66, %v67
    %v70 = vsel %vm68, %v67, %v66
    %71 = vrot.lane.b32.xlu0 %v69, 35
    %v72 = vpop.permute.xlu0 %71
    %73 = vrot.lane.b32.xlu0 %v70, 35
    %v74 = vpop.permute.xlu0 %73
    %v75 = vadd.f32 %v64, %v72
    %v76 = vadd.f32 %v65, %v74
    %v77 = vrot.slane %v18, 3
    %v78 = vrot.slane %v19, 3
    %vm79 = vcmp.lt.s32.totalorder %v23, 5
    %v80 = vsel %vm79, %v77, %v78
    %v81 = vsel %vm79, %v78, %v77
    %82 = vrot.lane.b32.xlu0 %v80, 42
    %v83 = vpop.permute.xlu0 %82
    %84 = vrot.lane.b32.xlu0 %v81, 42
    %v85 = vpop.permute.xlu0 %84
    %v86 = vadd.f32 %v75, %v83
    %v87 = vadd.f32 %v76, %v85
    %v88 = vpack.c.bf16 %v86, %v86
    %v89 = vpack.c.bf16 %v87, %v87
    %90 = vst [vmem:[#allocation2] sm:$0xf] %v88
    %91 = vst [vmem:[#allocation2 + $0x4] sm:$0xf] %v89
    %s92 = scalar_lea.vmem %s0, 16
    %v93 = vld [vmem:[%s92] sm:$0xff]
    %v94 = vld [vmem:[%s92 + $0x8] sm:$0xff]
    %v95 = vsel %vm17, %v93, 0.0
    %v96 = vsel %vm17, %v94, 0.0
    %v97 = vrot.slane %v95, 5
    %v98 = vrot.slane %v96, 5
    %v99 = vsel %vm24, %v97, %v98
    %v100 = vsel %vm24, %v98, %v97
    %v101 = vrot.slane %v95, 6
    %v102 = vrot.slane %v96, 6
    %v103 = vsel %vm29, %v101, %v102
    %v104 = vsel %vm29, %v102, %v101
    %105 = vrot.lane.b32.xlu0 %v104, 7
    %v106 = vpop.permute.xlu0 %105
    %107 = vrot.lane.b32.xlu0 %v103, 7
    %v108 = vpop.permute.xlu0 %107
    %v109 = vadd.f32 %v100, %v106
    %v110 = vadd.f32 %v99, %v108
    %v111 = vrot.slane %v95, 7
    %v112 = vrot.slane %v96, 7
    %v113 = vsel %vm40, %v111, %v112
    %v114 = vsel %vm40, %v112, %v111
    %115 = vrot.lane.b32.xlu0 %v114, 14
    %v116 = vpop.permute.xlu0 %115
    %117 = vrot.lane.b32.xlu0 %v113, 14
    %v118 = vpop.permute.xlu0 %117
    %v119 = vadd.f32 %v109, %v116
    %v120 = vadd.f32 %v110, %v118
    %121 = vrot.lane.b32.xlu0 %v95, 21
    %v122 = vpop.permute.xlu0 %121
    %123 = vrot.lane.b32.xlu0 %v96, 21
    %v124 = vpop.permute.xlu0 %123
    %v125 = vadd.f32 %v119, %v122
    %v126 = vadd.f32 %v120, %v124
    %v127 = vrot.slane %v95, 1
    %v128 = vrot.slane %v96, 1
    %v129 = vsel %vm57, %v127, %v128
    %v130 = vsel %vm57, %v128, %v127
    %131 = vrot.lane.b32.xlu0 %v129, 28
    %v132 = vpop.permute.xlu0 %131
    %133 = vrot.lane.b32.xlu0 %v130, 28
    %v134 = vpop.permute.xlu0 %133
    %v135 = vadd.f32 %v125, %v132
    %v136 = vadd.f32 %v126, %v134
    %v137 = vrot.slane %v95, 2
    %v138 = vrot.slane %v96, 2
    %v139 = vsel %vm68, %v137, %v138
    %v140 = vsel %vm68, %v138, %v137
    %141 = vrot.lane.b32.xlu0 %v139, 35
    %v142 = vpop.permute.xlu0 %141
    %143 = vrot.lane.b32.xlu0 %v140, 35
    %v144 = vpop.permute.xlu0 %143
    %v145 = vadd.f32 %v135, %v142
    %v146 = vadd.f32 %v136, %v144
    %v147 = vrot.slane %v95, 3
    %v148 = vrot.slane %v96, 3
    %v149 = vsel %vm79, %v147, %v148
    %v150 = vsel %vm79, %v148, %v147
    %151 = vrot.lane.b32.xlu0 %v149, 42
    %v152 = vpop.permute.xlu0 %151
    %153 = vrot.lane.b32.xlu0 %v150, 42
    %v154 = vpop.permute.xlu0 %153
    %v155 = vadd.f32 %v145, %v152
    %v156 = vadd.f32 %v146, %v154
    %v157 = vpack.c.bf16 %v155, %v155
    %v158 = vpack.c.bf16 %v156, %v156
    %159 = vst [vmem:[#allocation2 + $0x8] sm:$0xf] %v157
    %160 = vst [vmem:[#allocation2 + $0xc] sm:$0xf] %v158
    %s161 = scalar_lea.vmem %s0, 32
    %v162 = vld [vmem:[%s161] sm:$0xff]
    %v163 = vld [vmem:[%s161 + $0x8] sm:$0xff]
    %v164 = vsel %vm17, %v162, 0.0
    %v165 = vsel %vm17, %v163, 0.0
    %v166 = vrot.slane %v164, 5
    %v167 = vrot.slane %v165, 5
    %v168 = vsel %vm24, %v166, %v167
    %v169 = vsel %vm24, %v167, %v166
    %v170 = vrot.slane %v164, 6
    %v171 = vrot.slane %v165, 6
    %v172 = vsel %vm29, %v170, %v171
    %v173 = vsel %vm29, %v171, %v170
    %174 = vrot.lane.b32.xlu0 %v173, 7
    %v175 = vpop.permute.xlu0 %174
    %176 = vrot.lane.b32.xlu0 %v172, 7
    %v177 = vpop.permute.xlu0 %176
    %v178 = vadd.f32 %v169, %v175
    %v179 = vadd.f32 %v168, %v177
    %v180 = vrot.slane %v164, 7
    %v181 = vrot.slane %v165, 7
    %v182 = vsel %vm40, %v180, %v181
    %v183 = vsel %vm40, %v181, %v180
    %184 = vrot.lane.b32.xlu0 %v183, 14
    %v185 = vpop.permute.xlu0 %184
    %186 = vrot.lane.b32.xlu0 %v182, 14
    %v187 = vpop.permute.xlu0 %186
    %v188 = vadd.f32 %v178, %v185
    %v189 = vadd.f32 %v179, %v187
    %190 = vrot.lane.b32.xlu0 %v164, 21
    %v191 = vpop.permute.xlu0 %190
    %192 = vrot.lane.b32.xlu0 %v165, 21
    %v193 = vpop.permute.xlu0 %192
    %v194 = vadd.f32 %v188, %v191
    %v195 = vadd.f32 %v189, %v193
    %v196 = vrot.slane %v164, 1
    %v197 = vrot.slane %v165, 1
    %v198 = vsel %vm57, %v196, %v197
    %v199 = vsel %vm57, %v197, %v196
    %200 = vrot.lane.b32.xlu0 %v198, 28
    %v201 = vpop.permute.xlu0 %200
    %202 = vrot.lane.b32.xlu0 %v199, 28
    %v203 = vpop.permute.xlu0 %202
    %v204 = vadd.f32 %v194, %v201
    %v205 = vadd.f32 %v195, %v203
    %v206 = vrot.slane %v164, 2
    %v207 = vrot.slane %v165, 2
    %v208 = vsel %vm68, %v206, %v207
    %v209 = vsel %vm68, %v207, %v206
    %210 = vrot.lane.b32.xlu0 %v208, 35
    %v211 = vpop.permute.xlu0 %210
    %212 = vrot.lane.b32.xlu0 %v209, 35
    %v213 = vpop.permute.xlu0 %212
    %v214 = vadd.f32 %v204, %v211
    %v215 = vadd.f32 %v205, %v213
    %v216 = vrot.slane %v164, 3
    %v217 = vrot.slane %v165, 3
    %v218 = vsel %vm79, %v216, %v217
    %v219 = vsel %vm79, %v217, %v216
    %220 = vrot.lane.b32.xlu0 %v218, 42
    %v221 = vpop.permute.xlu0 %220
    %222 = vrot.lane.b32.xlu0 %v219, 42
    %v223 = vpop.permute.xlu0 %222
    %v224 = vadd.f32 %v214, %v221
    %v225 = vadd.f32 %v215, %v223
    %v226 = vpack.c.bf16 %v224, %v224
    %v227 = vpack.c.bf16 %v225, %v225
    %228 = vst [vmem:[#allocation2 + $0x10] sm:$0xf] %v226
    %229 = vst [vmem:[#allocation2 + $0x14] sm:$0xf] %v227
    %s230 = scalar_lea.vmem %s0, 48
    %v231 = vld [vmem:[%s230] sm:$0xff]
    %v232 = vld [vmem:[%s230 + $0x8] sm:$0xff]
    %v233 = vsel %vm17, %v231, 0.0
    %v234 = vsel %vm17, %v232, 0.0
    %v235 = vrot.slane %v233, 5
    %v236 = vrot.slane %v234, 5
    %v237 = vsel %vm24, %v235, %v236
    %v238 = vsel %vm24, %v236, %v235
    %v239 = vrot.slane %v233, 6
    %v240 = vrot.slane %v234, 6
    %v241 = vsel %vm29, %v239, %v240
    %v242 = vsel %vm29, %v240, %v239
    %243 = vrot.lane.b32.xlu0 %v242, 7
    %v244 = vpop.permute.xlu0 %243
    %245 = vrot.lane.b32.xlu0 %v241, 7
    %v246 = vpop.permute.xlu0 %245
    %v247 = vadd.f32 %v238, %v244
    %v248 = vadd.f32 %v237, %v246
    %v249 = vrot.slane %v233, 7
    %v250 = vrot.slane %v234, 7
    %v251 = vsel %vm40, %v249, %v250
    %v252 = vsel %vm40, %v250, %v249
    %253 = vrot.lane.b32.xlu0 %v252, 14
    %v254 = vpop.permute.xlu0 %253
    %255 = vrot.lane.b32.xlu0 %v251, 14
    %v256 = vpop.permute.xlu0 %255
    %v257 = vadd.f32 %v247, %v254
    %v258 = vadd.f32 %v248, %v256
    %259 = vrot.lane.b32.xlu0 %v233, 21
    %v260 = vpop.permute.xlu0 %259
    %261 = vrot.lane.b32.xlu0 %v234, 21
    %v262 = vpop.permute.xlu0 %261
    %v263 = vadd.f32 %v257, %v260
    %v264 = vadd.f32 %v258, %v262
    %v265 = vrot.slane %v233, 1
    %v266 = vrot.slane %v234, 1
    %v267 = vsel %vm57, %v265, %v266
    %v268 = vsel %vm57, %v266, %v265
    %269 = vrot.lane.b32.xlu0 %v267, 28
    %v270 = vpop.permute.xlu0 %269
    %271 = vrot.lane.b32.xlu0 %v268, 28
    %v272 = vpop.permute.xlu0 %271
    %v273 = vadd.f32 %v263, %v270
    %v274 = vadd.f32 %v264, %v272
    %v275 = vrot.slane %v233, 2
    %v276 = vrot.slane %v234, 2
    %v277 = vsel %vm68, %v275, %v276
    %v278 = vsel %vm68, %v276, %v275
    %279 = vrot.lane.b32.xlu0 %v277, 35
    %v280 = vpop.permute.xlu0 %279
    %281 = vrot.lane.b32.xlu0 %v278, 35
    %v282 = vpop.permute.xlu0 %281
    %v283 = vadd.f32 %v273, %v280
    %v284 = vadd.f32 %v274, %v282
    %v285 = vrot.slane %v233, 3
    %v286 = vrot.slane %v234, 3
    %v287 = vsel %vm79, %v285, %v286
    %v288 = vsel %vm79, %v286, %v285
    %289 = vrot.lane.b32.xlu0 %v287, 42
    %v290 = vpop.permute.xlu0 %289
    %291 = vrot.lane.b32.xlu0 %v288, 42
    %v292 = vpop.permute.xlu0 %291
    %v293 = vadd.f32 %v283, %v290
    %v294 = vadd.f32 %v284, %v292
    %v295 = vpack.c.bf16 %v293, %v293
    %v296 = vpack.c.bf16 %v294, %v294
    %297 = vst [vmem:[#allocation2 + $0x18] sm:$0xf] %v295
    %298 = vst [vmem:[#allocation2 + $0x1c] sm:$0xf] %v296
    %v299 = vld [vmem:[%s1] sm:$0xf]
    %v300 = vld [vmem:[%s1 + $0x4] sm:$0xf]
    %v301 = vld [vmem:[%s1 + $0x8] sm:$0xf]
    %v302 = vld [vmem:[%s1 + $0xc] sm:$0xf]
    %v303 = vld [vmem:[%s1 + $0x10] sm:$0xf]
    %v304 = vld [vmem:[%s1 + $0x14] sm:$0xf]
    %v305 = vld [vmem:[%s1 + $0x18] sm:$0xf]
    %v306 = vld [vmem:[%s1 + $0x1c] sm:$0xf]
    %v307 = vld [vmem:[%s1 + $0x20] sm:$0xf]
    %v308 = vld [vmem:[%s1 + $0x24] sm:$0xf]
    %v309 = vld [vmem:[%s1 + $0x28] sm:$0xf]
    %v310 = vld [vmem:[%s1 + $0x2c] sm:$0xf]
    %v311 = vld [vmem:[%s1 + $0x30] sm:$0xf]
    %v312 = vld [vmem:[%s1 + $0x34] sm:$0xf]
    %v313 = vld [vmem:[%s1 + $0x38] sm:$0xf]
    %v314 = vld [vmem:[%s1 + $0x3c] sm:$0xf]
    %v315 = vld [vmem:[#allocation2] sm:$0xf]
    %v316 = vld [vmem:[#allocation2 + $0x4] sm:$0xf]
    %v317 = vld [vmem:[#allocation2 + $0x8] sm:$0xf]
    %v318 = vld [vmem:[#allocation2 + $0xc] sm:$0xf]
    %v319 = vld [vmem:[#allocation2 + $0x10] sm:$0xf]
    %v320 = vld [vmem:[#allocation2 + $0x14] sm:$0xf]
    %v321 = vld [vmem:[#allocation2 + $0x18] sm:$0xf]
    %v322 = vld [vmem:[#allocation2 + $0x1c] sm:$0xf]
    %v331 = vunpack.c.l.b16 %v315
    %v332 = vunpack.c.l.b16 %v316
    %v333 = vunpack.c.l.b16 %v317
    %v334 = vunpack.c.l.b16 %v318
    %v335 = vunpack.c.l.b16 %v319
    %v336 = vunpack.c.l.b16 %v320
    %v337 = vunpack.c.l.b16 %v321
    %v338 = vunpack.c.l.b16 %v322
    %v339 = vpack.c.b16 %v332, %v331
    %v340 = vpack.c.b16 %v334, %v333
    %v341 = vpack.c.b16 %v336, %v335
    %v342 = vpack.c.b16 %v338, %v337
    %v363 = vunpack.c.l.b16 %v299
    %v364 = vunpack.c.l.b16 %v300
    %v365 = vunpack.c.l.b16 %v301
    %v366 = vunpack.c.l.b16 %v302
    %v367 = vunpack.c.l.b16 %v303
    %v368 = vunpack.c.l.b16 %v304
    %v369 = vunpack.c.l.b16 %v305
    %v370 = vunpack.c.l.b16 %v306
    %v371 = vunpack.c.l.b16 %v307
    %v372 = vunpack.c.l.b16 %v308
    %v373 = vunpack.c.l.b16 %v309
    %v374 = vunpack.c.l.b16 %v310
    %v375 = vunpack.c.l.b16 %v311
    %v376 = vunpack.c.l.b16 %v312
    %v377 = vunpack.c.l.b16 %v313
    %v378 = vunpack.c.l.b16 %v314
    %v379 = vpack.c.b16 %v364, %v363
    %v380 = vpack.c.b16 %v366, %v365
    %v381 = vpack.c.b16 %v368, %v367
    %v382 = vpack.c.b16 %v370, %v369
    %v383 = vpack.c.b16 %v372, %v371
    %v384 = vpack.c.b16 %v374, %v373
    %v385 = vpack.c.b16 %v376, %v375
    %v386 = vpack.c.b16 %v378, %v377
    %395 = vmatpush.bf16.msra.mxu0 %v386
    %396 = vmatpush.bf16.msra.mxu0 %v385
    %397 = vmatpush.bf16.msra.mxu0 %v384
    %398 = vmatpush.bf16.msra.mxu0 %v383
    %399 = vmatpush.bf16.msra.mxu0 %v382
    %400 = vmatpush.bf16.msra.mxu0 %v381
    %401 = vmatpush.bf16.msra.mxu0 %v380
    %402 = vmatpush.bf16.msra.mxu0 %v379
    %403 = vmatmul.bf16.gmra.mxu0 %v339
    %v404 = vpop.f32.mrf.mxu0
    %v405 = vadd.f32 0.0, %v404
    %v406 = vpop.f32.mrf.mxu0
    %v407 = vadd.f32 0.0, %v406
    %408 = vmatmul.bf16.gmra.mxu0 %v340
    %v409 = vpop.f32.mrf.mxu0
    %v410 = vadd.f32 0.0, %v409
    %v411 = vpop.f32.mrf.mxu0
    %v412 = vadd.f32 0.0, %v411
    %413 = vmatmul.bf16.gmra.mxu0 %v341
    %v414 = vpop.f32.mrf.mxu0
    %v415 = vadd.f32 0.0, %v414
    %v416 = vpop.f32.mrf.mxu0
    %v417 = vadd.f32 0.0, %v416
    %418 = vmatmul.bf16.gmra.mxu0 %v342
    %v419 = vpop.f32.mrf.mxu0
    %v420 = vadd.f32 0.0, %v419
    %v421 = vpop.f32.mrf.mxu0
    %v422 = vadd.f32 0.0, %v421
    %423 = vdwg.mxu0
    %v424 = vld [vmem:[%s2] sm:$0xff]
    %v425 = vld [vmem:[%s2 + $0x8] sm:$0xff]
    %v426 = vadd.f32 %v405, %v424
    %v427 = vadd.f32 %v407, %v425
    %428 = vst [vmem:[#allocation3] sm:$0xff] %v426
    %429 = vst [vmem:[#allocation3 + $0x8] sm:$0xff] %v427
    %v430 = vadd.f32 %v410, %v424
    %v431 = vadd.f32 %v412, %v425
    %s432 = scalar_lea.vmem [#allocation3], 16
    %433 = vst [vmem:[%s432] sm:$0xff] %v430
    %434 = vst [vmem:[%s432 + $0x8] sm:$0xff] %v431
    %v435 = vadd.f32 %v415, %v424
    %v436 = vadd.f32 %v417, %v425
    %s437 = scalar_lea.vmem [#allocation3], 32
    %438 = vst [vmem:[%s437] sm:$0xff] %v435
    %439 = vst [vmem:[%s437 + $0x8] sm:$0xff] %v436
    %v440 = vadd.f32 %v420, %v424
    %v441 = vadd.f32 %v422, %v425
    %s442 = scalar_lea.vmem [#allocation3], 48
    %443 = vst [vmem:[%s442] sm:$0xff] %v440
    %444 = vst [vmem:[%s442 + $0x8] sm:$0xff] %v441
    // Predicated region
    $region14: #{tpu_custom_call.1} parent=1 // pred_check
      _
    $region15: #{tpu_custom_call.1} parent=1 // pred_check_branch
      %446 = sbr.rel (0) target = $region17
    $region16: #{tpu_custom_call.1} parent=1 // pred_region
      %448 = vsyncadd [#allocation4], 0
      %s449 = sshll.u32 [#allocation3], 4
      %s450 = int_to_ptr.vmem [resolvable:$true] %s449
      %s451 = sshll.u32 %s3, 4
      %s452 = int_to_ptr.hbm [resolvable:$true] %s451
      %457 = dma.vmem_to_hbm [thread:$0]  %s450, 1024, %s452, [#allocation4], 128, 128, 8
    $region17: #{tpu_custom_call.1} parent=1 // pred_fallthru
      _
    // Predicated region
    $region18: #{tpu_custom_call.1} parent=1 // pred_check
      _
    $region19: #{tpu_custom_call.1} parent=1 // pred_check_branch
      %459 = sbr.rel (0) target = $region21
    $region20: #{tpu_custom_call.1} parent=1 // pred_region
      %461 = dma.done [#allocation4], 1024
    $region21: #{tpu_custom_call.1} parent=1 // pred_fallthru
      _
    %462 = vsyncpa [#allocation4], 1

</llo_original>
